<compile_context>
chip_gen: v7x
topology: tpu7x:2x2x1
jax: 0.10.0
libtpu: 0.0.40
codegen_flags: <defaults>
</compile_context>

<pallas_src>
import functools

import jax
import jax.numpy as jnp
from jax import lax
from jax.experimental import pallas as pl
from jax.experimental.pallas import tpu as pltpu

N_FRAMES = 5          # n_frames_input * 1 -> conv1 in-channels
C_HIDDEN = 64
C_OUT = 2
K = 3                 # kernel size, padding = 1
TAPS = K * K


def _video_kernel(x_ref, mask_ref, w1_ref, w2_ref, b2_ref, o_ref, *,
                  H, W, compute_dtype):
    """One grid step: `nb` images, 2 fused MXU matmuls + register scatter each.

    x_ref   : (nb, Cin, H*W)        flat unpadded input block (input dtype)
    mask_ref: (2, H*W)              periodic column masks (compute dtype)
                                    row 0: 0 where col == 0, row 1: 0 where col == W-1
    w1_ref  : (64, 9*Cin + 1)       conv1 weights, columns (tap, cin) + bias column
    w2_ref  : (9*2, 64)             conv2 weights, rows (tap, cout)
    b2_ref  : (2, 1)                conv2 bias (f32)
    o_ref   : (nb, 2, H*W)          lane-dense output block (f32)
    """
    D = H * W
    cdt = compute_dtype
    nb = x_ref.shape[0]

    # ---- image-independent values, hoisted out of the batch loop ----------
    w1 = w1_ref[...]                                   # (64, 46)
    w2 = w2_ref[...]                                   # (18, 64)
    b2b = jnp.broadcast_to(b2_ref[...], (C_OUT, D))    # (2, D) f32

    cm_first = mask_ref[0:1, :]                        # 0 where col == 0
    cm_last = mask_ref[1:2, :]                         # 0 where col == W-1

    uidx = lax.broadcasted_iota(jnp.int32, (1, D), 1)
    rm_top = (uidx >= W).astype(cdt)                   # 0 on first output row
    rm_bot = (uidx < (D - W)).astype(cdt)              # 0 on last output row

    ones_row = jnp.ones((1, D), cdt)                   # bias row for conv1

    def body(i, carry):
        xi = x_ref[i].astype(cdt)                      # (Cin, D), cast in-kernel

        # Zero-padding in the W direction via masked copies: taps with dx=0
        # read "col-1" (which aliases col W-1 of a neighbouring row in the
        # flat layout) and taps with dx=2 read "col+1" (aliases col 0).
        x_dx0 = xi * cm_last
        x_dx2 = xi * cm_first

        # ---- conv1: flat im2col (pure lane shifts), single MXU matmul -----
        slabs = []
        for dy in range(K):
            for dx in range(K):
                src = x_dx0 if dx == 0 else (x_dx2 if dx == 2 else xi)
                off = (dy - 1) * W + (dx - 1)
                # slab[u] = src[(u + off) mod D]; wrapped / out-of-image rows
                # are zeroed by the row masks below.
                # (jnp.roll with a static shift lowers to a lane rotate;
                #  pltpu.roll is an equivalent drop-in.)
                slab = jnp.roll(src, -off, axis=1) if off != 0 else src
                if dy == 0:
                    slab = slab * rm_top
                elif dy == 2:
                    slab = slab * rm_bot
                slabs.append(slab)
        p1 = jnp.concatenate(slabs + [ones_row], axis=0)        # (46, D)

        h = jnp.dot(w1, p1, preferred_element_type=jnp.float32)  # (64, D) f32
        h = jnp.maximum(h, 0.0)                                   # ReLU (f32)
        h_c = h.astype(cdt)

        # ---- conv2: channel matmul, then 9 shifted+masked adds in-register
        g = jnp.dot(w2, h_c, preferred_element_type=jnp.float32)  # (18, D) f32
        acc = b2b
        for dy in range(K):
            for dx in range(K):
                t = dy * K + dx
                off = (dy - 1) * W + (dx - 1)
                gt = g[C_OUT * t:C_OUT * (t + 1), :]               # (2, D)
                sh = jnp.roll(gt, -off, axis=1) if off != 0 else gt
                if dx == 0:
                    sh = sh * cm_first
                elif dx == 2:
                    sh = sh * cm_last
                if dy == 0:
                    sh = sh * rm_top
                elif dy == 2:
                    sh = sh * rm_bot
                acc = acc + sh

        # Lane-dense (last dim = H*W) store of this image's result.
        o_ref[i] = acc
        return carry

    lax.fori_loop(0, nb, body, 0)


def _pick_batch_block(n, d, in_itemsize=4):
    """Largest divisor of n (<= 8) with modest blocks and grid length >= 2.

    TODO(synk): on v6e (single TensorCore) drop the grid>=2 preference and
    simply maximize nb under the VMEM budget; on v7x prefer grid >= 4.
    """
    budget = 8 * 2**20
    best = 1
    for cand in range(1, min(n, 8) + 1):
        if n % cand:
            continue
        blk = 2 * cand * d * (N_FRAMES * in_itemsize + C_OUT * 4)
        if blk > budget:
            continue
        if n // cand >= 2 or n < 2:
            best = cand
    return best


def _vmem_limit_bytes(nb, d, csize):
    """Rough per-step VMEM need; only raise the scoped limit if required."""
    blocks = 2 * nb * d * (N_FRAMES * 4 + C_OUT * 4)            # in/out, 2-buf
    masks = 2 * 2 * d * csize
    per_image = d * (3 * N_FRAMES * csize                        # x + 2 copies
                     + (TAPS * N_FRAMES + 1) * csize             # p1
                     + C_HIDDEN * (4 + csize)                    # h, h_c
                     + TAPS * C_OUT * 4                          # g
                     + 6 * C_OUT * 4)                            # acc + temps
    est = blocks + masks + per_image + (2 << 20)
    if est <= 16 * 2**20:
        return None
    return int(min(2 * est, 100 * 2**20))


@functools.partial(jax.jit, static_argnames=("compute_dtype", "batch_block"))
def advanced_video_model(x_nchw, w1, b1, w2, b2, *,
                         compute_dtype=jnp.bfloat16, batch_block=None):
    """Forward pass.

    x_nchw : (N, 5, H, W)  float32 (PyTorch NCHW convention)
    w1     : (64, 5, 3, 3) conv1.weight     b1 : (64,) conv1.bias
    w2     : (2, 64, 3, 3) conv2.weight     b2 : (2,)  conv2.bias
    returns: (N, 2, H, W)  float32
    """
    N, Cin, H, W = x_nchw.shape
    assert Cin == N_FRAMES
    D = H * W
    cdt = jnp.dtype(compute_dtype)
    csize = cdt.itemsize

    nb = (batch_block if batch_block is not None
          else _pick_batch_block(N, D, x_nchw.dtype.itemsize))
    assert N % nb == 0
    grid = (N // nb,)

    # Free reshape (row-major split of HBM bytes); no pad / cast / transpose.
    x_flat = x_nchw.reshape(N, Cin, D)

    # conv1 weight -> (64, 9*Cin), columns (tap = dy*3+dx, cin); bias folded.
    w1_mat = jnp.transpose(w1, (0, 2, 3, 1)).reshape(C_HIDDEN, TAPS * Cin)
    w1_aug = jnp.concatenate([w1_mat, b1.reshape(C_HIDDEN, 1)],
                             axis=1).astype(cdt)                  # (64, 46)
    # conv2 weight -> (9*2, 64), rows (tap = dy*3+dx, cout).
    w2_mat = jnp.transpose(w2, (2, 3, 0, 1)).reshape(TAPS * C_OUT,
                                                     C_HIDDEN).astype(cdt)
    b2_col = b2.reshape(C_OUT, 1).astype(jnp.float32)

    # Periodic 0/1 column masks, shared by conv1 (source side) and conv2
    # (output side) to realize the 1-pixel zero halo without a padded buffer.
    col = jnp.arange(D, dtype=jnp.int32) % W
    masks = jnp.stack([(col != 0), (col != W - 1)]).astype(cdt)   # (2, D)

    kernel = functools.partial(_video_kernel, H=H, W=W, compute_dtype=cdt)

    out_flat = pl.pallas_call(
        kernel,
        out_shape=jax.ShapeDtypeStruct((N, C_OUT, D), jnp.float32),
        grid_spec=pltpu.PrefetchScalarGridSpec(
            num_scalar_prefetch=0,
            grid=grid,
            in_specs=[
                pl.BlockSpec((nb, Cin, D), lambda n: (n, 0, 0)),
                pl.BlockSpec((2, D), lambda n: (0, 0)),
                pl.BlockSpec((C_HIDDEN, TAPS * Cin + 1), lambda n: (0, 0)),
                pl.BlockSpec((TAPS * C_OUT, C_HIDDEN), lambda n: (0, 0)),
                pl.BlockSpec((C_OUT, 1), lambda n: (0, 0)),
            ],
            out_specs=pl.BlockSpec((nb, C_OUT, D), lambda n: (n, 0, 0)),
        ),
        compiler_params=pltpu.CompilerParams(
            dimension_semantics=("parallel",),
            vmem_limit_bytes=_vmem_limit_bytes(nb, D, csize)),
    )(x_flat, masks, w1_aug, w2_mat, b2_col)

    # Free reshape (splits the lane-dense last dim) back to NCHW.
    return out_flat.reshape(N, C_OUT, H, W)


def _reference(x_nchw, w1, b1, w2, b2):
    """Pure-JAX reference using lax.conv (NCHW, matching PyTorch)."""
    dn = lax.conv_dimension_numbers(x_nchw.shape, w1.shape,
                                    ("NCHW", "OIHW", "NCHW"))
    h = lax.conv_general_dilated(x_nchw, w1, (1, 1), ((1, 1), (1, 1)),
                                 dimension_numbers=dn)
    h = jnp.maximum(h + b1.reshape(1, -1, 1, 1), 0.0)
    dn2 = lax.conv_dimension_numbers(h.shape, w2.shape,
                                     ("NCHW", "OIHW", "NCHW"))
    o = lax.conv_general_dilated(h, w2, (1, 1), ((1, 1), (1, 1)),
                                 dimension_numbers=dn2)
    return o + b2.reshape(1, -1, 1, 1)


if __name__ == "__main__":
    key = jax.random.PRNGKey(0)
    kx, k1, k2, k3, k4 = jax.random.split(key, 5)

    N, H, W = 2, 16, 16
    x = jax.random.normal(kx, (N, N_FRAMES, H, W), dtype=jnp.float32)

    # Deterministic synthetic parameters (same shapes as the nn.Module).
    w1 = jax.random.normal(k1, (C_HIDDEN, N_FRAMES, K, K), jnp.float32) * 0.1
    b1 = jax.random.normal(k2, (C_HIDDEN,), jnp.float32) * 0.1
    w2 = jax.random.normal(k3, (C_OUT, C_HIDDEN, K, K), jnp.float32) * 0.1
    b2 = jax.random.normal(k4, (C_OUT,), jnp.float32) * 0.1

    ref = jax.block_until_ready(_reference(x, w1, b1, w2, b2))
    ref_norm = float(jnp.linalg.norm(ref))

    # f32 MXU-operand path.
    out_f32 = jax.block_until_ready(
        advanced_video_model(x, w1, b1, w2, b2, compute_dtype=jnp.float32))
    assert out_f32.shape == (N, C_OUT, H, W)
    rel_f32 = float(jnp.linalg.norm(out_f32 - ref)) / ref_norm
    assert rel_f32 < 2e-2, f"f32 path rel err {rel_f32}"

    # bf16 MXU-operand path (default on all chips; f32 accumulation).
    out_bf16 = jax.block_until_ready(advanced_video_model(x, w1, b1, w2, b2))
    assert out_bf16.shape == (N, C_OUT, H, W)
    rel_bf16 = float(jnp.linalg.norm(out_bf16 - ref)) / ref_norm
    assert rel_bf16 < 3e-2, f"bf16 path rel err {rel_bf16}"

    print("KERNEL_OK")
</pallas_src>

<mosaic_0001>
module attributes {stable_mosaic.version = 11 : i64} {
  func.func @_video_kernel(%arg0: i32, %arg1: memref<1x5x256xf32, #tpu.memory_space<vmem>>, %arg2: memref<2x256xf32, #tpu.memory_space<vmem>>, %arg3: memref<64x46xf32, #tpu.memory_space<vmem>>, %arg4: memref<18x64xf32, #tpu.memory_space<vmem>>, %arg5: memref<2x1xf32, #tpu.memory_space<vmem>>, %arg6: memref<1x2x256xf32, #tpu.memory_space<vmem>>) attributes {dimension_semantics = [#tpu.dimension_semantics<parallel>], iteration_bounds = array<i64: 2>, scalar_prefetch = 0 : i64, scratch_operands = 0 : i64, tpu.core_type = #tpu.core_type<tc>, window_params = [{transform_indices = @transform_0, window_bounds = array<i64: 1, 5, 256>}, {pipeline_mode = #tpu.pipeline_mode<synchronous>, transform_indices = @transform_1, window_bounds = array<i64: 2, 256>}, {pipeline_mode = #tpu.pipeline_mode<synchronous>, transform_indices = @transform_2, window_bounds = array<i64: 64, 46>}, {pipeline_mode = #tpu.pipeline_mode<synchronous>, transform_indices = @transform_3, window_bounds = array<i64: 18, 64>}, {pipeline_mode = #tpu.pipeline_mode<synchronous>, transform_indices = @transform_4, window_bounds = array<i64: 2, 1>}, {transform_indices = @transform_5, window_bounds = array<i64: 1, 2, 256>}]} {
    %c0 = arith.constant 0 : index
    %c0_0 = arith.constant 0 : index
    %0 = vector.load %arg3[%c0, %c0_0] : memref<64x46xf32, #tpu.memory_space<vmem>>, vector<64x46xf32>
    %c0_1 = arith.constant 0 : index
    %c0_2 = arith.constant 0 : index
    %1 = vector.load %arg4[%c0_1, %c0_2] : memref<18x64xf32, #tpu.memory_space<vmem>>, vector<18x64xf32>
    %c0_3 = arith.constant 0 : index
    %c0_4 = arith.constant 0 : index
    %2 = vector.load %arg5[%c0_3, %c0_4] : memref<2x1xf32, #tpu.memory_space<vmem>>, vector<2x1xf32>
    %3 = vector.shape_cast %2 : vector<2x1xf32> to vector<2x1xf32>
    %4 = vector.broadcast %3 : vector<2x1xf32> to vector<2x256xf32>
    %c0_5 = arith.constant 0 : index
    %c0_6 = arith.constant 0 : index
    %5 = vector.load %arg2[%c0_5, %c0_6] : memref<2x256xf32, #tpu.memory_space<vmem>>, vector<1x256xf32>
    %c1 = arith.constant 1 : index
    %c0_7 = arith.constant 0 : index
    %6 = vector.load %arg2[%c1, %c0_7] : memref<2x256xf32, #tpu.memory_space<vmem>>, vector<1x256xf32>
    %7 = tpu.iota {dimensions = array<i32: 1>} : vector<1x256xi32>
    %c16_i32 = arith.constant 16 : i32
    %8 = vector.broadcast %c16_i32 : i32 to vector<1x256xi32>
    %9 = arith.cmpi sge, %7, %8 : vector<1x256xi32>
    %10 = arith.extui %9 : vector<1x256xi1> to vector<1x256xi32>
    %11 = arith.sitofp %10 : vector<1x256xi32> to vector<1x256xf32>
    %c240_i32 = arith.constant 240 : i32
    %12 = vector.broadcast %c240_i32 : i32 to vector<1x256xi32>
    %13 = arith.cmpi slt, %7, %12 : vector<1x256xi32>
    %14 = arith.extui %13 : vector<1x256xi1> to vector<1x256xi32>
    %15 = arith.sitofp %14 : vector<1x256xi32> to vector<1x256xf32>
    %cst = arith.constant 1.000000e+00 : f32
    %16 = vector.broadcast %cst : f32 to vector<1x256xf32>
    %c0_i32 = arith.constant 0 : i32
    %17 = arith.index_cast %c0_i32 : i32 to index
    %c0_8 = arith.constant 0 : index
    %c0_9 = arith.constant 0 : index
    %18 = vector.load %arg1[%17, %c0_8, %c0_9] : memref<1x5x256xf32, #tpu.memory_space<vmem>>, vector<1x5x256xf32>
    %19 = vector.shape_cast %18 : vector<1x5x256xf32> to vector<5x256xf32>
    %20 = vector.broadcast %6 : vector<1x256xf32> to vector<5x256xf32>
    %21 = arith.mulf %19, %20 : vector<5x256xf32>
    %22 = vector.broadcast %5 : vector<1x256xf32> to vector<5x256xf32>
    %23 = arith.mulf %19, %22 : vector<5x256xf32>
    %24 = vector.extract_strided_slice %21 {offsets = [0, 239], sizes = [5, 17], strides = [1, 1]} : vector<5x256xf32> to vector<5x17xf32>
    %25 = vector.extract_strided_slice %21 {offsets = [0, 0], sizes = [5, 239], strides = [1, 1]} : vector<5x256xf32> to vector<5x239xf32>
    %26 = tpu.concatenate %24, %25 in 1 : vector<5x17xf32>, vector<5x239xf32> -> vector<5x256xf32>
    %27 = vector.broadcast %11 : vector<1x256xf32> to vector<5x256xf32>
    %28 = arith.mulf %26, %27 : vector<5x256xf32>
    %29 = vector.extract_strided_slice %19 {offsets = [0, 240], sizes = [5, 16], strides = [1, 1]} : vector<5x256xf32> to vector<5x16xf32>
    %30 = vector.extract_strided_slice %19 {offsets = [0, 0], sizes = [5, 240], strides = [1, 1]} : vector<5x256xf32> to vector<5x240xf32>
    %31 = tpu.concatenate %29, %30 in 1 : vector<5x16xf32>, vector<5x240xf32> -> vector<5x256xf32>
    %32 = vector.broadcast %11 : vector<1x256xf32> to vector<5x256xf32>
    %33 = arith.mulf %31, %32 : vector<5x256xf32>
    %34 = vector.extract_strided_slice %23 {offsets = [0, 241], sizes = [5, 15], strides = [1, 1]} : vector<5x256xf32> to vector<5x15xf32>
    %35 = vector.extract_strided_slice %23 {offsets = [0, 0], sizes = [5, 241], strides = [1, 1]} : vector<5x256xf32> to vector<5x241xf32>
    %36 = tpu.concatenate %34, %35 in 1 : vector<5x15xf32>, vector<5x241xf32> -> vector<5x256xf32>
    %37 = vector.broadcast %11 : vector<1x256xf32> to vector<5x256xf32>
    %38 = arith.mulf %36, %37 : vector<5x256xf32>
    %39 = vector.extract_strided_slice %21 {offsets = [0, 255], sizes = [5, 1], strides = [1, 1]} : vector<5x256xf32> to vector<5x1xf32>
    %40 = vector.extract_strided_slice %21 {offsets = [0, 0], sizes = [5, 255], strides = [1, 1]} : vector<5x256xf32> to vector<5x255xf32>
    %41 = tpu.concatenate %39, %40 in 1 : vector<5x1xf32>, vector<5x255xf32> -> vector<5x256xf32>
    %42 = vector.extract_strided_slice %23 {offsets = [0, 1], sizes = [5, 255], strides = [1, 1]} : vector<5x256xf32> to vector<5x255xf32>
    %43 = vector.extract_strided_slice %23 {offsets = [0, 0], sizes = [5, 1], strides = [1, 1]} : vector<5x256xf32> to vector<5x1xf32>
    %44 = tpu.concatenate %42, %43 in 1 : vector<5x255xf32>, vector<5x1xf32> -> vector<5x256xf32>
    %45 = vector.extract_strided_slice %21 {offsets = [0, 15], sizes = [5, 241], strides = [1, 1]} : vector<5x256xf32> to vector<5x241xf32>
    %46 = vector.extract_strided_slice %21 {offsets = [0, 0], sizes = [5, 15], strides = [1, 1]} : vector<5x256xf32> to vector<5x15xf32>
    %47 = tpu.concatenate %45, %46 in 1 : vector<5x241xf32>, vector<5x15xf32> -> vector<5x256xf32>
    %48 = vector.broadcast %15 : vector<1x256xf32> to vector<5x256xf32>
    %49 = arith.mulf %47, %48 : vector<5x256xf32>
    %50 = vector.extract_strided_slice %19 {offsets = [0, 16], sizes = [5, 240], strides = [1, 1]} : vector<5x256xf32> to vector<5x240xf32>
    %51 = vector.extract_strided_slice %19 {offsets = [0, 0], sizes = [5, 16], strides = [1, 1]} : vector<5x256xf32> to vector<5x16xf32>
    %52 = tpu.concatenate %50, %51 in 1 : vector<5x240xf32>, vector<5x16xf32> -> vector<5x256xf32>
    %53 = vector.broadcast %15 : vector<1x256xf32> to vector<5x256xf32>
    %54 = arith.mulf %52, %53 : vector<5x256xf32>
    %55 = vector.extract_strided_slice %23 {offsets = [0, 17], sizes = [5, 239], strides = [1, 1]} : vector<5x256xf32> to vector<5x239xf32>
    %56 = vector.extract_strided_slice %23 {offsets = [0, 0], sizes = [5, 17], strides = [1, 1]} : vector<5x256xf32> to vector<5x17xf32>
    %57 = tpu.concatenate %55, %56 in 1 : vector<5x239xf32>, vector<5x17xf32> -> vector<5x256xf32>
    %58 = vector.broadcast %15 : vector<1x256xf32> to vector<5x256xf32>
    %59 = arith.mulf %57, %58 : vector<5x256xf32>
    %60 = tpu.concatenate %28, %33, %38, %41, %19, %44, %49, %54, %59, %16 in 0 : vector<5x256xf32>, vector<5x256xf32>, vector<5x256xf32>, vector<5x256xf32>, vector<5x256xf32>, vector<5x256xf32>, vector<5x256xf32>, vector<5x256xf32>, vector<5x256xf32>, vector<1x256xf32> -> vector<46x256xf32>
    %cst_10 = arith.constant dense<0.000000e+00> : vector<64x256xf32>
    %61 = tpu.matmul %0, %60, %cst_10 {dimension_numbers = #tpu.dot_dimension_numbers<[1], [0], [0], [1], [0, 0, 1, 1], [], []>} : vector<64x46xf32>, vector<46x256xf32>, vector<64x256xf32> -> vector<64x256xf32>
    %cst_11 = arith.constant 0.000000e+00 : f32
    %62 = vector.broadcast %cst_11 : f32 to vector<64x256xf32>
    %63 = arith.maximumf %61, %62 : vector<64x256xf32>
    %cst_12 = arith.constant dense<0.000000e+00> : vector<18x256xf32>
    %64 = tpu.matmul %1, %63, %cst_12 {dimension_numbers = #tpu.dot_dimension_numbers<[1], [0], [0], [1], [0, 0, 1, 1], [], []>} : vector<18x64xf32>, vector<64x256xf32>, vector<18x256xf32> -> vector<18x256xf32>
    %65 = vector.extract_strided_slice %64 {offsets = [0, 0], sizes = [2, 256], strides = [1, 1]} : vector<18x256xf32> to vector<2x256xf32>
    %66 = vector.extract_strided_slice %65 {offsets = [0, 239], sizes = [2, 17], strides = [1, 1]} : vector<2x256xf32> to vector<2x17xf32>
    %67 = vector.extract_strided_slice %65 {offsets = [0, 0], sizes = [2, 239], strides = [1, 1]} : vector<2x256xf32> to vector<2x239xf32>
    %68 = tpu.concatenate %66, %67 in 1 : vector<2x17xf32>, vector<2x239xf32> -> vector<2x256xf32>
    %69 = vector.broadcast %5 : vector<1x256xf32> to vector<2x256xf32>
    %70 = arith.mulf %68, %69 : vector<2x256xf32>
    %71 = vector.broadcast %11 : vector<1x256xf32> to vector<2x256xf32>
    %72 = arith.mulf %70, %71 : vector<2x256xf32>
    %73 = arith.addf %4, %72 : vector<2x256xf32>
    %74 = vector.extract_strided_slice %64 {offsets = [2, 0], sizes = [2, 256], strides = [1, 1]} : vector<18x256xf32> to vector<2x256xf32>
    %75 = vector.extract_strided_slice %74 {offsets = [0, 240], sizes = [2, 16], strides = [1, 1]} : vector<2x256xf32> to vector<2x16xf32>
    %76 = vector.extract_strided_slice %74 {offsets = [0, 0], sizes = [2, 240], strides = [1, 1]} : vector<2x256xf32> to vector<2x240xf32>
    %77 = tpu.concatenate %75, %76 in 1 : vector<2x16xf32>, vector<2x240xf32> -> vector<2x256xf32>
    %78 = vector.broadcast %11 : vector<1x256xf32> to vector<2x256xf32>
    %79 = arith.mulf %77, %78 : vector<2x256xf32>
    %80 = arith.addf %73, %79 : vector<2x256xf32>
    %81 = vector.extract_strided_slice %64 {offsets = [4, 0], sizes = [2, 256], strides = [1, 1]} : vector<18x256xf32> to vector<2x256xf32>
    %82 = vector.extract_strided_slice %81 {offsets = [0, 241], sizes = [2, 15], strides = [1, 1]} : vector<2x256xf32> to vector<2x15xf32>
    %83 = vector.extract_strided_slice %81 {offsets = [0, 0], sizes = [2, 241], strides = [1, 1]} : vector<2x256xf32> to vector<2x241xf32>
    %84 = tpu.concatenate %82, %83 in 1 : vector<2x15xf32>, vector<2x241xf32> -> vector<2x256xf32>
    %85 = vector.broadcast %6 : vector<1x256xf32> to vector<2x256xf32>
    %86 = arith.mulf %84, %85 : vector<2x256xf32>
    %87 = vector.broadcast %11 : vector<1x256xf32> to vector<2x256xf32>
    %88 = arith.mulf %86, %87 : vector<2x256xf32>
    %89 = arith.addf %80, %88 : vector<2x256xf32>
    %90 = vector.extract_strided_slice %64 {offsets = [6, 0], sizes = [2, 256], strides = [1, 1]} : vector<18x256xf32> to vector<2x256xf32>
    %91 = vector.extract_strided_slice %90 {offsets = [0, 255], sizes = [2, 1], strides = [1, 1]} : vector<2x256xf32> to vector<2x1xf32>
    %92 = vector.extract_strided_slice %90 {offsets = [0, 0], sizes = [2, 255], strides = [1, 1]} : vector<2x256xf32> to vector<2x255xf32>
    %93 = tpu.concatenate %91, %92 in 1 : vector<2x1xf32>, vector<2x255xf32> -> vector<2x256xf32>
    %94 = vector.broadcast %5 : vector<1x256xf32> to vector<2x256xf32>
    %95 = arith.mulf %93, %94 : vector<2x256xf32>
    %96 = arith.addf %89, %95 : vector<2x256xf32>
    %97 = vector.extract_strided_slice %64 {offsets = [8, 0], sizes = [2, 256], strides = [1, 1]} : vector<18x256xf32> to vector<2x256xf32>
    %98 = arith.addf %96, %97 : vector<2x256xf32>
    %99 = vector.extract_strided_slice %64 {offsets = [10, 0], sizes = [2, 256], strides = [1, 1]} : vector<18x256xf32> to vector<2x256xf32>
    %100 = vector.extract_strided_slice %99 {offsets = [0, 1], sizes = [2, 255], strides = [1, 1]} : vector<2x256xf32> to vector<2x255xf32>
    %101 = vector.extract_strided_slice %99 {offsets = [0, 0], sizes = [2, 1], strides = [1, 1]} : vector<2x256xf32> to vector<2x1xf32>
    %102 = tpu.concatenate %100, %101 in 1 : vector<2x255xf32>, vector<2x1xf32> -> vector<2x256xf32>
    %103 = vector.broadcast %6 : vector<1x256xf32> to vector<2x256xf32>
    %104 = arith.mulf %102, %103 : vector<2x256xf32>
    %105 = arith.addf %98, %104 : vector<2x256xf32>
    %106 = vector.extract_strided_slice %64 {offsets = [12, 0], sizes = [2, 256], strides = [1, 1]} : vector<18x256xf32> to vector<2x256xf32>
    %107 = vector.extract_strided_slice %106 {offsets = [0, 15], sizes = [2, 241], strides = [1, 1]} : vector<2x256xf32> to vector<2x241xf32>
    %108 = vector.extract_strided_slice %106 {offsets = [0, 0], sizes = [2, 15], strides = [1, 1]} : vector<2x256xf32> to vector<2x15xf32>
    %109 = tpu.concatenate %107, %108 in 1 : vector<2x241xf32>, vector<2x15xf32> -> vector<2x256xf32>
    %110 = vector.broadcast %5 : vector<1x256xf32> to vector<2x256xf32>
    %111 = arith.mulf %109, %110 : vector<2x256xf32>
    %112 = vector.broadcast %15 : vector<1x256xf32> to vector<2x256xf32>
    %113 = arith.mulf %111, %112 : vector<2x256xf32>
    %114 = arith.addf %105, %113 : vector<2x256xf32>
    %115 = vector.extract_strided_slice %64 {offsets = [14, 0], sizes = [2, 256], strides = [1, 1]} : vector<18x256xf32> to vector<2x256xf32>
    %116 = vector.extract_strided_slice %115 {offsets = [0, 16], sizes = [2, 240], strides = [1, 1]} : vector<2x256xf32> to vector<2x240xf32>
    %117 = vector.extract_strided_slice %115 {offsets = [0, 0], sizes = [2, 16], strides = [1, 1]} : vector<2x256xf32> to vector<2x16xf32>
    %118 = tpu.concatenate %116, %117 in 1 : vector<2x240xf32>, vector<2x16xf32> -> vector<2x256xf32>
    %119 = vector.broadcast %15 : vector<1x256xf32> to vector<2x256xf32>
    %120 = arith.mulf %118, %119 : vector<2x256xf32>
    %121 = arith.addf %114, %120 : vector<2x256xf32>
    %122 = vector.extract_strided_slice %64 {offsets = [16, 0], sizes = [2, 256], strides = [1, 1]} : vector<18x256xf32> to vector<2x256xf32>
    %123 = vector.extract_strided_slice %122 {offsets = [0, 17], sizes = [2, 239], strides = [1, 1]} : vector<2x256xf32> to vector<2x239xf32>
    %124 = vector.extract_strided_slice %122 {offsets = [0, 0], sizes = [2, 17], strides = [1, 1]} : vector<2x256xf32> to vector<2x17xf32>
    %125 = tpu.concatenate %123, %124 in 1 : vector<2x239xf32>, vector<2x17xf32> -> vector<2x256xf32>
    %126 = vector.broadcast %6 : vector<1x256xf32> to vector<2x256xf32>
    %127 = arith.mulf %125, %126 : vector<2x256xf32>
    %128 = vector.broadcast %15 : vector<1x256xf32> to vector<2x256xf32>
    %129 = arith.mulf %127, %128 : vector<2x256xf32>
    %130 = arith.addf %121, %129 : vector<2x256xf32>
    %131 = arith.index_cast %c0_i32 : i32 to index
    %c0_13 = arith.constant 0 : index
    %c0_14 = arith.constant 0 : index
    %132 = vector.load %arg6[%131, %c0_13, %c0_14] : memref<1x2x256xf32, #tpu.memory_space<vmem>>, vector<1x2x256xf32>
    %133 = vector.shape_cast %132 : vector<1x2x256xf32> to vector<2x256xf32>
    %134 = vector.shape_cast %130 : vector<2x256xf32> to vector<1x2x256xf32>
    tpu.vector_store %arg6[%131, %c0_13, %c0_14], %134 {strides = array<i32>} : memref<1x2x256xf32, #tpu.memory_space<vmem>>, vector<1x2x256xf32>,
    %c1_i32 = arith.constant 1 : i32
    return
  }
  func.func @transform_0(%arg0: i32) -> (i32, i32, i32) {
    %c0_i32 = arith.constant 0 : i32
    %c0_i32_0 = arith.constant 0 : i32
    %c0_i32_1 = arith.constant 0 : i32
    return %arg0, %c0_i32, %c0_i32_0 : i32, i32, i32
  }
  func.func @transform_1(%arg0: i32) -> (i32, i32) {
    %c0_i32 = arith.constant 0 : i32
    %c0_i32_0 = arith.constant 0 : i32
    %c0_i32_1 = arith.constant 0 : i32
    return %c0_i32, %c0_i32_0 : i32, i32
  }
  func.func @transform_2(%arg0: i32) -> (i32, i32) {
    %c0_i32 = arith.constant 0 : i32
    %c0_i32_0 = arith.constant 0 : i32
    %c0_i32_1 = arith.constant 0 : i32
    return %c0_i32, %c0_i32_0 : i32, i32
  }
  func.func @transform_3(%arg0: i32) -> (i32, i32) {
    %c0_i32 = arith.constant 0 : i32
    %c0_i32_0 = arith.constant 0 : i32
    %c0_i32_1 = arith.constant 0 : i32
    return %c0_i32, %c0_i32_0 : i32, i32
  }
  func.func @transform_4(%arg0: i32) -> (i32, i32) {
    %c0_i32 = arith.constant 0 : i32
    %c0_i32_0 = arith.constant 0 : i32
    %c0_i32_1 = arith.constant 0 : i32
    return %c0_i32, %c0_i32_0 : i32, i32
  }
  func.func @transform_5(%arg0: i32) -> (i32, i32, i32) {
    %c0_i32 = arith.constant 0 : i32
    %c0_i32_0 = arith.constant 0 : i32
    %c0_i32_1 = arith.constant 0 : i32
    return %arg0, %c0_i32, %c0_i32_0 : i32, i32, i32
  }
}

</mosaic_0001>

<llo_original>
// kernel: advanced_video_model.1
$region0: #{advanced_video_model.1}
  #allocation0 [shape = 'u32[]', space=smem, size = 0x4, offset = 0x4, fixed_abs, tag = 'smem constant byte address 0x4 - core index']
  #allocation1 [shape = 'u32[144,128]{1,0:T(1,128)}', space=vmem, size = 0x12000, scoped, tag = 'internal scratch']
  %s0 = inlined_call_operand.vmem [shape: f32[2,5,256], index: 0, kind: input, shape index: {}]
  %s1 = inlined_call_operand.vmem [shape: f32[2,256], index: 1, kind: input, shape index: {}]
  %s2 = inlined_call_operand.vmem [shape: f32[64,46], index: 2, kind: input, shape index: {}]
  %s3 = inlined_call_operand.vmem [shape: f32[18,64], index: 3, kind: input, shape index: {}]
  %s4 = inlined_call_operand.vmem [shape: f32[2,1], index: 4, kind: input, shape index: {}]
  %s5 = inlined_call_operand.vmem [shape: f32[2,2,256], index: 5, kind: output, shape index: {}]
  %s6 = sld [smem:[#allocation0]]
  $region53: #{advanced_video_model.1} parent=0
    _
  %s8 = ssub.s32 1, %s6
  %s9 = scalar_select 0, %s8, %s6
  loop: start=0, step=1, limit=4
  $region2: #{advanced_video_model.1} parent=0 // loop_pre_header
    _
  $region3: #{advanced_video_model.1} parent=0 // loop_header
    %s11 = sphi 0, %s15
    %p12 = scmp.ge.s32.totalorder %s11, 4
    %s21 = sphi 0, %s23
    %s24 = sphi 0, %s21
    %s25 = sphi 0, %s24
    %s41 = sphi 0, %s25
    %s45 = sphi 0, %s45
    %s47 = sphi 0, %s45
    %s48 = sphi 0, %s47
    %s62 = sphi 0, %s48
    %s66 = sphi 0, %s66
    %s68 = sphi 0, %s66
    %s69 = sphi 0, %s68
    %s83 = sphi 0, %s69
    %s87 = sphi 0, %s87
    %s89 = sphi 0, %s87
    %s90 = sphi 0, %s89
    %s104 = sphi 0, %s90
    %s108 = sphi 0, %s108
    %s110 = sphi 0, %s108
    %s111 = sphi 0, %s110
    %s125 = sphi 0, %s111
    %s131 = sphi 0, %s133
    %s134 = sphi 0, %s131
    %s135 = sphi 0, %s134
    %s151 = sphi 0, %s135
  $region4: #{advanced_video_model.1} parent=0 // loop_header_branch
    %14 = sbr.rel (%p12) target = $region8
  $region5: #{advanced_video_model.1} parent=0 // loop_body
    %s16 = ssub.s32 %s11, 1
    %s17 = ssub.s32 %s11, 2
    %s18 = sadd.s32 %s11, 1
    %s19 = ssub.s32 %s11, %s18
    %p20 = scmp.eq.s32.totalorder %s19, 0
    %s22 = sadd.s32 %s21, 1
    %s23 = scalar_select %p20, %s21, %s22
    %p26 = pneg %p20
    %p27 = scmp.eq.s32.totalorder %s11, 1
    %p28 = por %p26, %p27
    %p29 = scmp.ne.s32.totalorder %s21, %s24
    %p30 = scmp.eq.s32.totalorder %s11, 0
    %p31 = por %p29, %p30
    %p32 = scmp.ne.s32.totalorder %s21, %s24
    %p33 = scmp.eq.s32.totalorder %s16, 1
    %p34 = por %p32, %p33
    %p35 = scmp.ne.s32.totalorder %s24, %s25
    %p36 = scmp.eq.s32.totalorder %s16, 0
    %p37 = por %p35, %p36
    %p38 = scmp.ne.s32.totalorder %s24, %s25
    %p39 = scmp.eq.s32.totalorder %s17, 1
    %p40 = por %p38, %p39
    %p42 = scmp.ne.s32.totalorder %s25, %s41
    %p43 = scmp.eq.s32.totalorder %s17, 0
    %p44 = por %p42, %p43
    %s46 = sadd.s32 %s45, 1
    %p49 = scmp.eq.s32.totalorder %s11, 1
    %p50 = scmp.ne.s32.totalorder %s45, %s47
    %p51 = scmp.eq.s32.totalorder %s11, 0
    %p52 = por %p50, %p51
    %p53 = scmp.ne.s32.totalorder %s45, %s47
    %p54 = scmp.eq.s32.totalorder %s16, 1
    %p55 = por %p53, %p54
    %p56 = scmp.ne.s32.totalorder %s47, %s48
    %p57 = scmp.eq.s32.totalorder %s16, 0
    %p58 = por %p56, %p57
    %p59 = scmp.ne.s32.totalorder %s47, %s48
    %p60 = scmp.eq.s32.totalorder %s17, 1
    %p61 = por %p59, %p60
    %p63 = scmp.ne.s32.totalorder %s48, %s62
    %p64 = scmp.eq.s32.totalorder %s17, 0
    %p65 = por %p63, %p64
    %s67 = sadd.s32 %s66, 1
    %p70 = scmp.eq.s32.totalorder %s11, 1
    %p71 = scmp.ne.s32.totalorder %s66, %s68
    %p72 = scmp.eq.s32.totalorder %s11, 0
    %p73 = por %p71, %p72
    %p74 = scmp.ne.s32.totalorder %s66, %s68
    %p75 = scmp.eq.s32.totalorder %s16, 1
    %p76 = por %p74, %p75
    %p77 = scmp.ne.s32.totalorder %s68, %s69
    %p78 = scmp.eq.s32.totalorder %s16, 0
    %p79 = por %p77, %p78
    %p80 = scmp.ne.s32.totalorder %s68, %s69
    %p81 = scmp.eq.s32.totalorder %s17, 1
    %p82 = por %p80, %p81
    %p84 = scmp.ne.s32.totalorder %s69, %s83
    %p85 = scmp.eq.s32.totalorder %s17, 0
    %p86 = por %p84, %p85
    %s88 = sadd.s32 %s87, 1
    %p91 = scmp.eq.s32.totalorder %s11, 1
    %p92 = scmp.ne.s32.totalorder %s87, %s89
    %p93 = scmp.eq.s32.totalorder %s11, 0
    %p94 = por %p92, %p93
    %p95 = scmp.ne.s32.totalorder %s87, %s89
    %p96 = scmp.eq.s32.totalorder %s16, 1
    %p97 = por %p95, %p96
    %p98 = scmp.ne.s32.totalorder %s89, %s90
    %p99 = scmp.eq.s32.totalorder %s16, 0
    %p100 = por %p98, %p99
    %p101 = scmp.ne.s32.totalorder %s89, %s90
    %p102 = scmp.eq.s32.totalorder %s17, 1
    %p103 = por %p101, %p102
    %p105 = scmp.ne.s32.totalorder %s90, %s104
    %p106 = scmp.eq.s32.totalorder %s17, 0
    %p107 = por %p105, %p106
    %s109 = sadd.s32 %s108, 1
    %p112 = scmp.eq.s32.totalorder %s11, 1
    %p113 = scmp.ne.s32.totalorder %s108, %s110
    %p114 = scmp.eq.s32.totalorder %s11, 0
    %p115 = por %p113, %p114
    %p116 = scmp.ne.s32.totalorder %s108, %s110
    %p117 = scmp.eq.s32.totalorder %s16, 1
    %p118 = por %p116, %p117
    %p119 = scmp.ne.s32.totalorder %s110, %s111
    %p120 = scmp.eq.s32.totalorder %s16, 0
    %p121 = por %p119, %p120
    %p122 = scmp.ne.s32.totalorder %s110, %s111
    %p123 = scmp.eq.s32.totalorder %s17, 1
    %p124 = por %p122, %p123
    %p126 = scmp.ne.s32.totalorder %s111, %s125
    %p127 = scmp.eq.s32.totalorder %s17, 0
    %p128 = por %p126, %p127
    %s129 = ssub.s32 %s11, %s18
    %p130 = scmp.eq.s32.totalorder %s129, 0
    %s132 = sadd.s32 %s131, 1
    %s133 = scalar_select %p130, %s131, %s132
    %p136 = pneg %p130
    %p137 = scmp.eq.s32.totalorder %s11, 1
    %p138 = por %p136, %p137
    %p139 = scmp.ne.s32.totalorder %s131, %s134
    %p140 = scmp.eq.s32.totalorder %s11, 0
    %p141 = por %p139, %p140
    %p142 = scmp.ne.s32.totalorder %s131, %s134
    %p143 = scmp.eq.s32.totalorder %s16, 1
    %p144 = por %p142, %p143
    %p145 = scmp.ne.s32.totalorder %s134, %s135
    %p146 = scmp.eq.s32.totalorder %s16, 0
    %p147 = por %p145, %p146
    %p148 = scmp.ne.s32.totalorder %s134, %s135
    %p149 = scmp.eq.s32.totalorder %s17, 1
    %p150 = por %p148, %p149
    %p152 = scmp.ne.s32.totalorder %s135, %s151
    %p153 = scmp.eq.s32.totalorder %s17, 0
    %p154 = por %p152, %p153
    %p155 = scmp.le.s32.totalorder 1, %s11
    %p156 = scmp.lt.s32.totalorder %s11, 3
    %p157 = pnand %p155, %p156
    %p158 = pneg %p157
    // Predicated region
    $region9: #{advanced_video_model.1} parent=5 // pred_check
      _
    $region10: #{advanced_video_model.1} parent=5 // pred_check_branch
      %160 = sbr.rel (%p157) target = $region12
    $region11: #{advanced_video_model.1} parent=5 // pred_region
      %s161 = ssub.s32 %s11, 1
      // Predicated region
      $region13: #{advanced_video_model.1} parent=11 // pred_check
        %p162 = pneg %p58
      $region14: #{advanced_video_model.1} parent=11 // pred_check_branch
        %164 = sbr.rel (%p162) target = $region16
      $region15: #{advanced_video_model.1} parent=11 // pred_region
        _
      $region16: #{advanced_video_model.1} parent=11 // pred_fallthru
        _
      // Predicated region
      $region17: #{advanced_video_model.1} parent=11 // pred_check
        %p165 = pneg %p79
      $region18: #{advanced_video_model.1} parent=11 // pred_check_branch
        %167 = sbr.rel (%p165) target = $region20
      $region19: #{advanced_video_model.1} parent=11 // pred_region
        _
      $region20: #{advanced_video_model.1} parent=11 // pred_fallthru
        _
      // Predicated region
      $region21: #{advanced_video_model.1} parent=11 // pred_check
        %p168 = pneg %p100
      $region22: #{advanced_video_model.1} parent=11 // pred_check_branch
        %170 = sbr.rel (%p168) target = $region24
      $region23: #{advanced_video_model.1} parent=11 // pred_region
        _
      $region24: #{advanced_video_model.1} parent=11 // pred_fallthru
        _
      // Predicated region
      $region25: #{advanced_video_model.1} parent=11 // pred_check
        %p171 = pneg %p121
      $region26: #{advanced_video_model.1} parent=11 // pred_check_branch
        %173 = sbr.rel (%p171) target = $region28
      $region27: #{advanced_video_model.1} parent=11 // pred_region
        _
      $region28: #{advanced_video_model.1} parent=11 // pred_fallthru
        _
    $region12: #{advanced_video_model.1} parent=5 // pred_fallthru
      _
    %p174 = scmp.lt.s32.totalorder %s11, 2
    // Predicated region
    $region29: #{advanced_video_model.1} parent=5 // pred_check
      %p175 = pneg %p174
    $region30: #{advanced_video_model.1} parent=5 // pred_check_branch
      %177 = sbr.rel (%p175) target = $region32
    $region31: #{advanced_video_model.1} parent=5 // pred_region
      // Predicated region
      $region33: #{advanced_video_model.1} parent=31 // pred_check
        %p178 = pneg %p31
      $region34: #{advanced_video_model.1} parent=31 // pred_check_branch
        %180 = sbr.rel (%p178) target = $region36
      $region35: #{advanced_video_model.1} parent=31 // pred_region
        %p181 = scmp.lt.s32.totalorder %s11, 1
        %s182 = scalar_select %p181, %s11, 1
        %s183 = smul.addr %s182, 2
        %s184 = smul.addr %s183, 8
        %s185 = scalar_lea.vmem %s0, %s184
      $region36: #{advanced_video_model.1} parent=31 // pred_fallthru
        _
    $region32: #{advanced_video_model.1} parent=5 // pred_fallthru
      _
    %p186 = scmp.le.s32.totalorder 1, %s11
    %p187 = scmp.lt.s32.totalorder %s11, 3
    %p188 = pnand %p186, %p187
    %p189 = pneg %p188
    // Predicated region
    $region37: #{advanced_video_model.1} parent=5 // pred_check
      _
    $region38: #{advanced_video_model.1} parent=5 // pred_check_branch
      %191 = sbr.rel (%p188) target = $region40
    $region39: #{advanced_video_model.1} parent=5 // pred_region
      %s192 = ssub.s32 %s11, 1
      %p193 = scmp.lt.s32.totalorder %s16, 1
      %s194 = scalar_select %p193, %s16, 1
      %s195 = smul.addr %s194, 2
      %s196 = smul.addr %s195, 8
      %s197 = scalar_lea.vmem %s0, %s196
      %p198 = pneg %p37
      %p199 = pneg %p34
      %p200 = pneg %p58
      %p201 = pneg %p55
      %p202 = pneg %p79
      %p203 = pneg %p76
      %p204 = pneg %p100
      %p205 = pneg %p97
      %p206 = pneg %p121
      %p207 = pneg %p118
      %p208 = pneg %p147
      %p209 = pneg %p144
      %p210 = scmp.lt.s32.totalorder %s16, 1
      %s211 = scalar_select %p210, %s16, 1
      %s212 = smul.addr %s211, 2
      %s213 = smul.addr %s212, 2
      %s214 = scalar_lea.vmem %s5, %s213
      %p215 = scmp.lt.s32.totalorder %s16, 1
      %s216 = scalar_select %p215, %s16, 1
      %s217 = smul.addr %s216, 2
      %s218 = smul.addr %s217, 8
      %s219 = scalar_lea.vmem %s0, %s218
      %p220 = scmp.lt.s32.totalorder %s16, 1
      %s221 = scalar_select %p220, %s16, 1
      %s222 = smul.addr %s221, 2
      %s223 = smul.addr %s222, 2
      %s224 = scalar_lea.vmem %s5, %s223
      %v225 = vld [vmem:[%s2] sm:$0xff]
      %v226 = vld [vmem:[%s2 + $0x8] sm:$0xff]
      %v227 = vld [vmem:[%s2 + $0x10] sm:$0xff]
      %v228 = vld [vmem:[%s2 + $0x18] sm:$0xff]
      %v229 = vld [vmem:[%s2 + $0x20] sm:$0xff]
      %v230 = vld [vmem:[%s2 + $0x28] sm:$0xff]
      %v231 = vld [vmem:[%s2 + $0x30] sm:$0xff]
      %v232 = vld [vmem:[%s2 + $0x38] sm:$0xff]
      %v233 = vld [vmem:[%s3] sm:$0xff]
      %v234 = vld [vmem:[%s3 + $0x8] sm:$0xff]
      %v235 = vld [vmem:[%s3 + $0x10] sm:$0x3]
      %v236 = vld [vmem:[%s4] sm:$0x3]
      %238 = vset.pattern.permute.xlu0 0
      %239 = vperm.xlu0 %238, %v236
      %v240 = vpop.permute.xlu0 %239
      %v242 = vld [vmem:[%s1] ss:$2 sm:$0x3]
      %s243 = scalar_lea.vmem %s1, 1
      %v244 = vld [vmem:[%s243] ss:$2 sm:$0x3]
      %v245 = vlaneseq
      %v246 = vand.u32 %v245, 127
      %v247 = vadd.s32 %v246, 128
      %vm248 = vcmp.ge.s32.totalorder %v246, 16
      %vm249 = vcmp.ge.s32.totalorder %v247, 16
      %v250 = vsel %vm248, 1, 0
      %v251 = vsel %vm249, 1, 0
      %v252 = vcvt.s32.f32 %v250
      %v253 = vcvt.s32.f32 %v251
      %vm254 = vcmp.lt.s32.totalorder %v246, 240
      %vm255 = vcmp.lt.s32.totalorder %v247, 240
      %v256 = vsel %vm254, 1, 0
      %v257 = vsel %vm255, 1, 0
      %v258 = vcvt.s32.f32 %v256
      %v259 = vcvt.s32.f32 %v257
      %v260 = vld [vmem:[%s219] sm:$0x1f]
      %v261 = vld [vmem:[%s219 + $0x8] sm:$0x1f]
      %v263 = vlaneseq
      %v264 = vshrl.u32 %v263, 7
      %v265 = vsub.s32 0, %v264
      %v266 = vrot.slane %v244, %v265
      %v267 = vlaneseq
      %v268 = vshrl.u32 %v267, 7
      %v269 = vsub.s32 1, %v268
      %v270 = vrot.slane %v244, %v269
      %v273 = vmul.f32 %v260, %v266
      %v274 = vmul.f32 %v261, %v270
      %v276 = vlaneseq
      %v277 = vshrl.u32 %v276, 7
      %v278 = vsub.s32 0, %v277
      %v279 = vrot.slane %v242, %v278
      %v280 = vlaneseq
      %v281 = vshrl.u32 %v280, 7
      %v282 = vsub.s32 1, %v281
      %v283 = vrot.slane %v242, %v282
      %v286 = vmul.f32 %v260, %v279
      %v287 = vmul.f32 %v261, %v283
      %289 = vrot.lane.b32.xlu0 %v274, 17
      %v290 = vpop.permute.xlu0 %289
      %293 = vrot.lane.b32.xlu0 %v273, 17
      %v294 = vpop.permute.xlu0 %293
      %vm295 = vcmask 138240
      %v296 = vsel %vm295, %v294, %v290
      %v299 = vsel %vm295, %v290, %v294
      %v300 = vmul.f32 %v299, %v252
      %v301 = vmul.f32 %v296, %v253
      %303 = vrot.lane.b32.xlu0 %v261, 16
      %v304 = vpop.permute.xlu0 %303
      %307 = vrot.lane.b32.xlu0 %v260, 16
      %v308 = vpop.permute.xlu0 %307
      %vm309 = vcmask 130048
      %v310 = vsel %vm309, %v308, %v304
      %v313 = vsel %vm309, %v304, %v308
      %v314 = vmul.f32 %v313, %v252
      %v315 = vmul.f32 %v310, %v253
      %317 = vrot.lane.b32.xlu0 %v287, 15
      %v318 = vpop.permute.xlu0 %317
      %321 = vrot.lane.b32.xlu0 %v286, 15
      %v322 = vpop.permute.xlu0 %321
      %vm323 = vcmask 121856
      %v324 = vsel %vm323, %v322, %v318
      %v327 = vsel %vm323, %v318, %v322
      %v328 = vmul.f32 %v327, %v252
      %v329 = vmul.f32 %v324, %v253
      %330 = vrot.lane.b32.xlu0 %v274, 1
      %v331 = vpop.permute.xlu0 %330
      %333 = vrot.lane.b32.xlu0 %v273, 1
      %v334 = vpop.permute.xlu0 %333
      %vm335 = vcmask 7168
      %v336 = vsel %vm335, %v334, %v331
      %v338 = vsel %vm335, %v331, %v334
      %339 = vrot.lane.b32.xlu0 %v286, 127
      %v340 = vpop.permute.xlu0 %339
      %341 = vrot.lane.b32.xlu0 %v287, 127
      %v342 = vpop.permute.xlu0 %341
      %vm343 = vcmask 1039360
      %v344 = vsel %vm343, %v340, %v342
      %v347 = vsel %vm343, %v342, %v340
      %348 = vrot.lane.b32.xlu0 %v273, 113
      %v349 = vpop.permute.xlu0 %348
      %350 = vrot.lane.b32.xlu0 %v274, 113
      %v351 = vpop.permute.xlu0 %350
      %vm352 = vcmask 924672
      %v353 = vsel %vm352, %v349, %v351
      %v357 = vsel %vm352, %v351, %v349
      %v358 = vmul.f32 %v353, %v258
      %v359 = vmul.f32 %v357, %v259
      %360 = vrot.lane.b32.xlu0 %v260, 112
      %v361 = vpop.permute.xlu0 %360
      %362 = vrot.lane.b32.xlu0 %v261, 112
      %v363 = vpop.permute.xlu0 %362
      %vm364 = vcmask 916480
      %v365 = vsel %vm364, %v361, %v363
      %v369 = vsel %vm364, %v363, %v361
      %v370 = vmul.f32 %v365, %v258
      %v371 = vmul.f32 %v369, %v259
      %372 = vrot.lane.b32.xlu0 %v286, 111
      %v373 = vpop.permute.xlu0 %372
      %374 = vrot.lane.b32.xlu0 %v287, 111
      %v375 = vpop.permute.xlu0 %374
      %vm376 = vcmask 908288
      %v377 = vsel %vm376, %v373, %v375
      %v381 = vsel %vm376, %v375, %v373
      %v382 = vmul.f32 %v377, %v258
      %v383 = vmul.f32 %v381, %v259
      %v386 = vrot.slane %v314, 3
      %v387 = vrot.slane %v315, 3
      %v392 = vrot.slane %v328, 6
      %v393 = vrot.slane %v329, 6
      %v397 = vrot.slane %v338, 1
      %v398 = vrot.slane %v336, 1
      %v401 = vrot.slane %v260, 4
      %v402 = vrot.slane %v261, 4
      %v406 = vrot.slane %v344, 7
      %v407 = vrot.slane %v347, 7
      %v412 = vrot.slane %v358, 2
      %v413 = vrot.slane %v359, 2
      %v418 = vrot.slane %v370, 5
      %v419 = vrot.slane %v371, 5
      %vm422 = vcmask 1044480
      %v423 = vsel %vm422, %v300, %v386
      %v424 = vsel %vm422, %v301, %v387
      %vm425 = vcmask 1041408
      %v426 = vsel %vm425, %v386, %v392
      %v427 = vsel %vm425, %v387, %v393
      %vm428 = vcmask 1046528
      %v429 = vsel %vm428, %v426, %v397
      %v430 = vsel %vm428, %v427, %v398
      %vm431 = vcmask 1043456
      %v432 = vsel %vm431, %v397, %v401
      %v433 = vsel %vm431, %v398, %v402
      %vm434 = vcmask 1040384
      %v435 = vsel %vm434, %v401, %v406
      %v436 = vsel %vm434, %v402, %v407
      %vm437 = vcmask 1045504
      %v438 = vsel %vm437, %v435, %v412
      %v439 = vsel %vm437, %v436, %v413
      %vm440 = vcmask 1042432
      %v441 = vsel %vm440, %v412, %v418
      %v442 = vsel %vm440, %v413, %v419
      %v443 = vsel %vm422, %v382, 1.0
      %v444 = vsel %vm422, %v383, 1.0
      %vm445 = vcmask 375808
      %v447 = vsel %vm445, %v225, 0
      %v450 = vsel %vm445, %v226, 0
      %v453 = vsel %vm445, %v227, 0
      %v456 = vsel %vm445, %v228, 0
      %v459 = vsel %vm445, %v229, 0
      %v462 = vsel %vm445, %v230, 0
      %v465 = vsel %vm445, %v231, 0
      %v468 = vsel %vm445, %v232, 0
      %v471 = vsel %vm437, %v443, 0
      %v474 = vsel %vm437, %v444, 0
      %476 = vmatprep.subr.mxu0 %v424
      %477 = vmatpush1.msra.mxu0 %v423
      %478 = vmatprep.subr.mxu0 %v430
      %479 = vmatpush1.msra.mxu0 %v429
      %480 = vmatprep.subr.mxu0 %v433
      %481 = vmatpush1.msra.mxu0 %v432
      %482 = vmatprep.subr.mxu0 %v439
      %483 = vmatpush1.msra.mxu0 %v438
      %484 = vmatprep.subr.mxu0 %v442
      %485 = vmatpush1.msra.mxu0 %v441
      %486 = vmatprep.subr.mxu0 %v474
      %487 = vmatpush1.msra.mxu0 %v471
      %488 = vmatprep.subr.mxu0 0.0
      %489 = vmatpush1.msra.mxu0 0.0
      %490 = vmatprep.subr.mxu0 0.0
      %491 = vmatpush1.msra.mxu0 0.0
      %492 = vmatprep.subr.mxu0 0.0
      %493 = vmatpush1.msra.mxu0 0.0
      %494 = vmatprep.subr.mxu0 0.0
      %495 = vmatpush1.msra.mxu0 0.0
      %496 = vmatprep.subr.mxu0 0.0
      %497 = vmatpush1.msra.mxu0 0.0
      %498 = vmatprep.subr.mxu0 0.0
      %499 = vmatpush1.msra.mxu0 0.0
      %500 = vmatprep.subr.mxu0 0.0
      %501 = vmatpush1.msra.mxu0 0.0
      %502 = vmatprep.subr.mxu0 0.0
      %503 = vmatpush1.msra.mxu0 0.0
      %504 = vmatprep.subr.mxu0 0.0
      %505 = vmatpush1.msra.mxu0 0.0
      %506 = vmatprep.subr.mxu0 0.0
      %507 = vmatpush1.msra.mxu0 0.0
      %508 = vmatprep.subr.mxu0 0.0
      %509 = vmatpush1.msra.mxu0 0.0
      %510 = vmatprep.subr.mxu0 0.0
      %511 = vmatpush1.msra.mxu0 0.0
      %512 = vmatprep.subr.mxu0 0.0
      %513 = vmatpush1.msra.mxu0 0.0
      %514 = vmatprep.subr.mxu0 0.0
      %515 = vmatpush1.msra.mxu0 0.0
      %516 = vmatprep.subr.mxu0 0.0
      %517 = vmatpush1.msra.mxu0 0.0
      %518 = vmatprep.subr.mxu0 0.0
      %519 = vmatpush1.msra.mxu0 0.0
      %520 = vmatprep.subr.mxu0 0.0
      %521 = vmatpush1.msra.mxu0 0.0
      %522 = vmatprep.subr.mxu0 0.0
      %523 = vmatpush1.msra.mxu0 0.0
      %524 = vmatprep.subr.mxu0 0.0
      %525 = vmatpush1.msra.mxu0 0.0
      %526 = vmatprep.subr.mxu0 0.0
      %527 = vmatpush1.msra.mxu0 0.0
      %528 = vmatprep.subr.mxu0 0.0
      %529 = vmatpush1.msra.mxu0 0.0
      %530 = vmatprep.subr.mxu0 0.0
      %531 = vmatpush1.msra.mxu0 0.0
      %532 = vmatprep.subr.mxu0 0.0
      %533 = vmatpush1.msra.mxu0 0.0
      %534 = vmatprep.subr.mxu0 0.0
      %535 = vmatpush1.msra.mxu0 0.0
      %536 = vmatprep.subr.mxu0 0.0
      %537 = vmatpush1.msra.mxu0 0.0
      %538 = vmatprep.subr.mxu0 0.0
      %539 = vmatpush1.msra.mxu0 0.0
      %540 = vmatprep.mubr.f32.mxu0 0.0
      %541 = vmatmul.mubr.f32.gmra.mrb[0].mxu0 %v447
      %v542 = vpop.f32.mrb[0].mxu0
      %v543 = vadd.f32 0.0, %v542
      %v544 = vpop.f32.mrb[0].mxu0
      %v545 = vadd.f32 0.0, %v544
      %546 = vmatprep.mubr.f32.mxu0 0.0
      %547 = vmatmul.mubr.f32.gmra.mrb[0].mxu0 %v450
      %v548 = vpop.f32.mrb[0].mxu0
      %v549 = vadd.f32 0.0, %v548
      %v550 = vpop.f32.mrb[0].mxu0
      %v551 = vadd.f32 0.0, %v550
      %552 = vmatprep.mubr.f32.mxu0 0.0
      %553 = vmatmul.mubr.f32.gmra.mrb[0].mxu0 %v453
      %v554 = vpop.f32.mrb[0].mxu0
      %v555 = vadd.f32 0.0, %v554
      %v556 = vpop.f32.mrb[0].mxu0
      %v557 = vadd.f32 0.0, %v556
      %558 = vmatprep.mubr.f32.mxu0 0.0
      %559 = vmatmul.mubr.f32.gmra.mrb[0].mxu0 %v456
      %v560 = vpop.f32.mrb[0].mxu0
      %v561 = vadd.f32 0.0, %v560
      %v562 = vpop.f32.mrb[0].mxu0
      %v563 = vadd.f32 0.0, %v562
      %564 = vmatprep.mubr.f32.mxu0 0.0
      %565 = vmatmul.mubr.f32.gmra.mrb[0].mxu0 %v459
      %v566 = vpop.f32.mrb[0].mxu0
      %v567 = vadd.f32 0.0, %v566
      %v568 = vpop.f32.mrb[0].mxu0
      %v569 = vadd.f32 0.0, %v568
      %570 = vmatprep.mubr.f32.mxu0 0.0
      %571 = vmatmul.mubr.f32.gmra.mrb[0].mxu0 %v462
      %v572 = vpop.f32.mrb[0].mxu0
      %v573 = vadd.f32 0.0, %v572
      %v574 = vpop.f32.mrb[0].mxu0
      %v575 = vadd.f32 0.0, %v574
      %576 = vmatprep.mubr.f32.mxu0 0.0
      %577 = vmatmul.mubr.f32.gmra.mrb[0].mxu0 %v465
      %v578 = vpop.f32.mrb[0].mxu0
      %v579 = vadd.f32 0.0, %v578
      %v580 = vpop.f32.mrb[0].mxu0
      %v581 = vadd.f32 0.0, %v580
      %582 = vmatprep.mubr.f32.mxu0 0.0
      %583 = vmatmul.mubr.f32.gmra.mrb[0].mxu0 %v468
      %v584 = vpop.f32.mrb[0].mxu0
      %v585 = vadd.f32 0.0, %v584
      %v586 = vpop.f32.mrb[0].mxu0
      %v587 = vadd.f32 0.0, %v586
      %588 = vdwg.mxu0
      %v589 = vmax.f32 %v543, 0.0
      %v590 = vmax.f32 %v545, 0.0
      %v591 = vmax.f32 %v549, 0.0
      %v592 = vmax.f32 %v551, 0.0
      %v593 = vmax.f32 %v555, 0.0
      %v594 = vmax.f32 %v557, 0.0
      %v595 = vmax.f32 %v561, 0.0
      %v596 = vmax.f32 %v563, 0.0
      %v597 = vmax.f32 %v567, 0.0
      %v598 = vmax.f32 %v569, 0.0
      %v599 = vmax.f32 %v573, 0.0
      %v600 = vmax.f32 %v575, 0.0
      %v601 = vmax.f32 %v579, 0.0
      %v602 = vmax.f32 %v581, 0.0
      %v603 = vmax.f32 %v585, 0.0
      %v604 = vmax.f32 %v587, 0.0
      %vm605 = vcmask 523264
      %v607 = vsel %vm605, %v233, 0
      %v610 = vsel %vm605, %v234, 0
      %v613 = vsel %vm605, %v235, 0
      %615 = vmatprep.subr.mxu0 %v590
      %616 = vmatpush1.msra.mxu0 %v589
      %617 = vmatprep.subr.mxu0 %v592
      %618 = vmatpush1.msra.mxu0 %v591
      %619 = vmatprep.subr.mxu0 %v594
      %620 = vmatpush1.msra.mxu0 %v593
      %621 = vmatprep.subr.mxu0 %v596
      %622 = vmatpush1.msra.mxu0 %v595
      %623 = vmatprep.subr.mxu0 %v598
      %624 = vmatpush1.msra.mxu0 %v597
      %625 = vmatprep.subr.mxu0 %v600
      %626 = vmatpush1.msra.mxu0 %v599
      %627 = vmatprep.subr.mxu0 %v602
      %628 = vmatpush1.msra.mxu0 %v601
      %629 = vmatprep.subr.mxu0 %v604
      %630 = vmatpush1.msra.mxu0 %v603
      %631 = vmatprep.subr.mxu0 0.0
      %632 = vmatpush1.msra.mxu0 0.0
      %633 = vmatprep.subr.mxu0 0.0
      %634 = vmatpush1.msra.mxu0 0.0
      %635 = vmatprep.subr.mxu0 0.0
      %636 = vmatpush1.msra.mxu0 0.0
      %637 = vmatprep.subr.mxu0 0.0
      %638 = vmatpush1.msra.mxu0 0.0
      %639 = vmatprep.subr.mxu0 0.0
      %640 = vmatpush1.msra.mxu0 0.0
      %641 = vmatprep.subr.mxu0 0.0
      %642 = vmatpush1.msra.mxu0 0.0
      %643 = vmatprep.subr.mxu0 0.0
      %644 = vmatpush1.msra.mxu0 0.0
      %645 = vmatprep.subr.mxu0 0.0
      %646 = vmatpush1.msra.mxu0 0.0
      %647 = vmatprep.subr.mxu0 0.0
      %648 = vmatpush1.msra.mxu0 0.0
      %649 = vmatprep.subr.mxu0 0.0
      %650 = vmatpush1.msra.mxu0 0.0
      %651 = vmatprep.subr.mxu0 0.0
      %652 = vmatpush1.msra.mxu0 0.0
      %653 = vmatprep.subr.mxu0 0.0
      %654 = vmatpush1.msra.mxu0 0.0
      %655 = vmatprep.subr.mxu0 0.0
      %656 = vmatpush1.msra.mxu0 0.0
      %657 = vmatprep.subr.mxu0 0.0
      %658 = vmatpush1.msra.mxu0 0.0
      %659 = vmatprep.subr.mxu0 0.0
      %660 = vmatpush1.msra.mxu0 0.0
      %661 = vmatprep.subr.mxu0 0.0
      %662 = vmatpush1.msra.mxu0 0.0
      %663 = vmatprep.subr.mxu0 0.0
      %664 = vmatpush1.msra.mxu0 0.0
      %665 = vmatprep.subr.mxu0 0.0
      %666 = vmatpush1.msra.mxu0 0.0
      %667 = vmatprep.subr.mxu0 0.0
      %668 = vmatpush1.msra.mxu0 0.0
      %669 = vmatprep.subr.mxu0 0.0
      %670 = vmatpush1.msra.mxu0 0.0
      %671 = vmatprep.subr.mxu0 0.0
      %672 = vmatpush1.msra.mxu0 0.0
      %673 = vmatprep.subr.mxu0 0.0
      %674 = vmatpush1.msra.mxu0 0.0
      %675 = vmatprep.subr.mxu0 0.0
      %676 = vmatpush1.msra.mxu0 0.0
      %677 = vmatprep.subr.mxu0 0.0
      %678 = vmatpush1.msra.mxu0 0.0
      %679 = vmatprep.mubr.f32.mxu0 0.0
      %680 = vmatmul.mubr.f32.gmra.mrb[0].mxu0 %v607
      %v681 = vpop.f32.mrb[0].mxu0
      %v682 = vadd.f32 0.0, %v681
      %v683 = vpop.f32.mrb[0].mxu0
      %v684 = vadd.f32 0.0, %v683
      %685 = vmatprep.mubr.f32.mxu0 0.0
      %686 = vmatmul.mubr.f32.gmra.mrb[0].mxu0 %v610
      %v687 = vpop.f32.mrb[0].mxu0
      %v688 = vadd.f32 0.0, %v687
      %v689 = vpop.f32.mrb[0].mxu0
      %v690 = vadd.f32 0.0, %v689
      %691 = vmatprep.mubr.f32.mxu0 0.0
      %692 = vmatmul.mubr.f32.gmra.mrb[0].mxu0 %v613
      %v693 = vpop.f32.mrb[0].mxu0
      %v694 = vadd.f32 0.0, %v693
      %v695 = vpop.f32.mrb[0].mxu0
      %v696 = vadd.f32 0.0, %v695
      %697 = vdwg.mxu0
      %699 = vrot.lane.b32.xlu0 %v684, 17
      %v700 = vpop.permute.xlu0 %699
      %703 = vrot.lane.b32.xlu0 %v682, 17
      %v704 = vpop.permute.xlu0 %703
      %v705 = vsel %vm295, %v704, %v700
      %v708 = vsel %vm295, %v700, %v704
      %v709 = vmul.f32 %v708, %v279
      %v710 = vmul.f32 %v705, %v283
      %v711 = vmul.f32 %v709, %v252
      %v712 = vmul.f32 %v710, %v253
      %v713 = vadd.f32 %v240, %v711
      %v714 = vadd.f32 %v240, %v712
      %715 = vrot.lane.b32.xlu0 %v684, 16
      %v716 = vpop.permute.xlu0 %715
      %718 = vrot.lane.b32.xlu0 %v682, 16
      %v719 = vpop.permute.xlu0 %718
      %v720 = vsel %vm309, %v719, %v716
      %v723 = vsel %vm309, %v716, %v719
      %v724 = vmul.f32 %v723, %v252
      %v725 = vmul.f32 %v720, %v253
      %v728 = vrot.slane %v724, 2
      %v729 = vrot.slane %v725, 2
      %v732 = vadd.f32 %v713, %v728
      %v733 = vadd.f32 %v714, %v729
      %734 = vrot.lane.b32.xlu0 %v684, 15
      %v735 = vpop.permute.xlu0 %734
      %737 = vrot.lane.b32.xlu0 %v682, 15
      %v738 = vpop.permute.xlu0 %737
      %v739 = vsel %vm323, %v738, %v735
      %v742 = vsel %vm323, %v735, %v738
      %v743 = vmul.f32 %v742, %v266
      %v744 = vmul.f32 %v739, %v270
      %v745 = vmul.f32 %v743, %v252
      %v746 = vmul.f32 %v744, %v253
      %v749 = vrot.slane %v745, 4
      %v750 = vrot.slane %v746, 4
      %v753 = vadd.f32 %v732, %v749
      %v754 = vadd.f32 %v733, %v750
      %755 = vrot.lane.b32.xlu0 %v684, 1
      %v756 = vpop.permute.xlu0 %755
      %758 = vrot.lane.b32.xlu0 %v682, 1
      %v759 = vpop.permute.xlu0 %758
      %v760 = vsel %vm335, %v759, %v756
      %v763 = vsel %vm335, %v756, %v759
      %v764 = vmul.f32 %v763, %v279
      %v765 = vmul.f32 %v760, %v283
      %v768 = vrot.slane %v764, 6
      %v769 = vrot.slane %v765, 6
      %v772 = vadd.f32 %v753, %v768
      %v773 = vadd.f32 %v754, %v769
      %v774 = vadd.f32 %v772, %v688
      %v775 = vadd.f32 %v773, %v690
      %778 = vrot.lane.b32.xlu0 %v688, 127
      %v779 = vpop.permute.xlu0 %778
      %780 = vrot.lane.b32.xlu0 %v690, 127
      %v781 = vpop.permute.xlu0 %780
      %v782 = vsel %vm343, %v779, %v781
      %v786 = vsel %vm343, %v781, %v779
      %v787 = vmul.f32 %v782, %v266
      %v788 = vmul.f32 %v786, %v270
      %v791 = vrot.slane %v787, 2
      %v792 = vrot.slane %v788, 2
      %v795 = vadd.f32 %v774, %v791
      %v796 = vadd.f32 %v775, %v792
      %797 = vrot.lane.b32.xlu0 %v688, 113
      %v798 = vpop.permute.xlu0 %797
      %799 = vrot.lane.b32.xlu0 %v690, 113
      %v800 = vpop.permute.xlu0 %799
      %v801 = vsel %vm352, %v798, %v800
      %v805 = vsel %vm352, %v800, %v798
      %v806 = vmul.f32 %v801, %v279
      %v807 = vmul.f32 %v805, %v283
      %v808 = vmul.f32 %v806, %v258
      %v809 = vmul.f32 %v807, %v259
      %v812 = vrot.slane %v808, 4
      %v813 = vrot.slane %v809, 4
      %v816 = vadd.f32 %v795, %v812
      %v817 = vadd.f32 %v796, %v813
      %818 = vrot.lane.b32.xlu0 %v688, 112
      %v819 = vpop.permute.xlu0 %818
      %820 = vrot.lane.b32.xlu0 %v690, 112
      %v821 = vpop.permute.xlu0 %820
      %v822 = vsel %vm364, %v819, %v821
      %v826 = vsel %vm364, %v821, %v819
      %v827 = vmul.f32 %v822, %v258
      %v828 = vmul.f32 %v826, %v259
      %v831 = vrot.slane %v827, 6
      %v832 = vrot.slane %v828, 6
      %v835 = vadd.f32 %v816, %v831
      %v836 = vadd.f32 %v817, %v832
      %839 = vrot.lane.b32.xlu0 %v694, 111
      %v840 = vpop.permute.xlu0 %839
      %841 = vrot.lane.b32.xlu0 %v696, 111
      %v842 = vpop.permute.xlu0 %841
      %v843 = vsel %vm376, %v840, %v842
      %v847 = vsel %vm376, %v842, %v840
      %v848 = vmul.f32 %v843, %v266
      %v849 = vmul.f32 %v847, %v270
      %v850 = vmul.f32 %v848, %v258
      %v851 = vmul.f32 %v849, %v259
      %v852 = vadd.f32 %v835, %v850
      %v853 = vadd.f32 %v836, %v851
      %v856 = vcombine.low %v852, %v853
      %v858 = vunpack.c.l.s4 1983009808
      %v859 = vunpack.c.0.s8 %v858
      %v860 = vlaneseq
      %v861 = vshrl.u32 %v860, 7
      %v862 = vsub.s32 %v859, %v861
      %v863 = vrot.slane %v856, %v862
      %865 = vst [vmem:[%s224] sm:$0xf] %v863
      %p866 = scmp.lt.s32.totalorder %s16, 1
      %s867 = scalar_select %p866, %s16, 1
      %s868 = smul.addr %s867, 2
      %s869 = smul.addr %s868, 2
      %s870 = scalar_lea.vmem %s5, %s869
      // Predicated region
      $region41: #{advanced_video_model.1} parent=39 // pred_check
        %p871 = pneg %p144
      $region42: #{advanced_video_model.1} parent=39 // pred_check_branch
        %873 = sbr.rel (%p871) target = $region44
      $region43: #{advanced_video_model.1} parent=39 // pred_region
        _
      $region44: #{advanced_video_model.1} parent=39 // pred_fallthru
        _
    $region40: #{advanced_video_model.1} parent=5 // pred_fallthru
      _
    %p874 = scmp.le.s32.totalorder 2, %s11
    // Predicated region
    $region45: #{advanced_video_model.1} parent=5 // pred_check
      %p875 = pneg %p874
    $region46: #{advanced_video_model.1} parent=5 // pred_check_branch
      %877 = sbr.rel (%p875) target = $region48
    $region47: #{advanced_video_model.1} parent=5 // pred_region
      %s878 = ssub.s32 %s11, 2
      // Predicated region
      $region49: #{advanced_video_model.1} parent=47 // pred_check
        %p879 = pneg %p150
      $region50: #{advanced_video_model.1} parent=47 // pred_check_branch
        %881 = sbr.rel (%p879) target = $region52
      $region51: #{advanced_video_model.1} parent=47 // pred_region
        %p882 = scmp.lt.s32.totalorder %s17, 1
        %s883 = scalar_select %p882, %s17, 1
        %s884 = smul.addr %s883, 2
        %s885 = smul.addr %s884, 2
        %s886 = scalar_lea.vmem %s5, %s885
      $region52: #{advanced_video_model.1} parent=47 // pred_fallthru
        _
    $region48: #{advanced_video_model.1} parent=5 // pred_fallthru
      _
  $region6: #{advanced_video_model.1} parent=0 // loop_footer
    %s15 = sadd.s32 1, %s11
  $region7: #{advanced_video_model.1} parent=0 // loop_footer_branch
    %10 = sbr.rel target = $region3
  $region8: #{advanced_video_model.1} parent=0 // loop_exit
    _

</llo_original>
